<compile_context>
chip_gen: v7x
topology: tpu7x:2x2x1
jax: 0.10.0
libtpu: 0.0.40
codegen_flags: <defaults>
</compile_context>

<pallas_src>
import jax
import jax.numpy as jnp
from jax.experimental import pallas as pl
from jax.experimental.pallas import tpu as pltpu

EPS = 1e-8
_VMEM_LIMIT_BYTES = 32 << 20     # explicit scoped-VMEM limit; safe on v5e/v6e/v7x


def _round_up(n, m):
    return ((n + m - 1) // m) * m


def _target_block_bytes():
    """Per-generation block budget (per buffer; 2x in + 2x out are live)."""
    try:
        info = pltpu.get_tpu_info()
        vmem = getattr(info, "vmem_capacity_bytes", None)
        if vmem is not None and vmem <= (64 << 20):
            # v7x-class (64 MiB VMEM, ~3.2 TB/s HBM): bigger blocks to keep the
            # per-grid-step overhead <10% of the DMA time.  4 bufs * 4 MiB =
            # 16 MiB, well under the explicit 32 MiB limit.
            return 4 << 20
    except Exception:
        pass
    # v5e / v6e (128 MiB VMEM, lower HBM BW): 2 MiB blocks already sit at the
    # HBM roofline; 4 bufs * 2 MiB = 8 MiB also fits v5e's 16 MiB default.
    return 2 << 20


def _make_kernel(eps):
    # Block: (tb, W, tf) — full window on the middle axis, so min/max is a
    # purely in-block reduction (no accumulator / no "arbitrary" grid axis).
    def kernel(x_ref, o_ref):
        x = x_ref[...]
        mn = jnp.min(x, axis=1, keepdims=True).astype(jnp.float32)   # (tb,1,tf)
        mx = jnp.max(x, axis=1, keepdims=True).astype(jnp.float32)
        # Scale in f32 (exact divide, once per column) so bf16/fp8 inputs keep
        # precision; cast back to the output dtype only on the store.
        inv = 1.0 / (mx - mn + eps)
        o_ref[...] = ((x.astype(jnp.float32) - mn) * inv).astype(o_ref.dtype)
    return kernel


def normalize_over_window(x, eps=EPS):
    """x: (B, W, F) -> (B, W, F), min-max normalized over the window axis."""
    B, W, F = x.shape
    itemsize = jnp.dtype(x.dtype).itemsize
    block_bytes = _target_block_bytes()

    # VMEM footprint of one (W, tf) slab including (sublane, lane) tile padding
    # (lanes pad to 128, sublanes to 8) so small-F blocks don't overrun VMEM.
    def slab_vmem(tf):
        return _round_up(W, 8) * _round_up(tf, 128) * itemsize

    # ---- F tile --------------------------------------------------------
    tf = F
    if F % 128 == 0 and slab_vmem(F) > block_bytes:
        # Tile F in 128-multiples so a big (W, F) slab never exceeds the block
        # budget (and never exceeds v7x's 64 MiB VMEM).
        tf = max(128, (block_bytes // max(1, slab_vmem(128))) * 128)
        tf = min(tf, F)
    if B == 1 and F % 128 == 0 and tf == F and F >= 256:
        # Single-batch inputs: split F so the grid has >= 2 steps (v7x megacore).
        tf = _round_up(F // 2, 128)
    # TODO(synk): F not a multiple of 128 with a huge (W, F) slab still ships
    # one whole slab per step; a two-pass running-min/max scheme over a W grid
    # axis would be needed for that regime (not required for these shapes).

    # ---- B tile --------------------------------------------------------
    tb = max(1, min(B, block_bytes // max(1, slab_vmem(tf))))
    if B >= 2 and pl.cdiv(F, tf) == 1:
        # Guarantee >= 2 grid steps so both v7x TensorCores stream.
        tb = min(tb, pl.cdiv(B, 2))

    grid = (pl.cdiv(B, tb), pl.cdiv(F, tf))

    cost = pl.CostEstimate(
        flops=4 * B * W * F,
        transcendentals=0,
        bytes_accessed=2 * B * W * F * itemsize,
    )

    return pl.pallas_call(
        _make_kernel(eps),
        out_shape=jax.ShapeDtypeStruct((B, W, F), x.dtype),
        grid_spec=pltpu.PrefetchScalarGridSpec(
            num_scalar_prefetch=0,
            grid=grid,
            in_specs=[pl.BlockSpec((tb, W, tf), lambda b, f: (b, 0, f))],
            out_specs=pl.BlockSpec((tb, W, tf), lambda b, f: (b, 0, f)),
        ),
        compiler_params=pltpu.CompilerParams(
            dimension_semantics=("parallel", "parallel"),
            vmem_limit_bytes=_VMEM_LIMIT_BYTES,
        ),
        cost_estimate=cost,
    )(x)


def _reference(x, eps=EPS):
    mn = jnp.min(x, axis=1, keepdims=True)
    mx = jnp.max(x, axis=1, keepdims=True)
    return (x - mn) / (mx - mn + eps)


if __name__ == "__main__":
    # Small shape implied by the module: batch=2, window(seq)=8, features=32.
    B, W, F = 2, 8, 32
    x = jax.random.normal(jax.random.PRNGKey(0), (B, W, F), dtype=jnp.float32)
    out = jax.block_until_ready(normalize_over_window(x))
    ref = _reference(x)
    assert out.shape == ref.shape
    assert jnp.allclose(out, ref, atol=1e-6, rtol=1e-5), "mismatch (F<128 path)"

    # Lane-dense path (F a multiple of 128) with >=2 grid steps.
    x2 = jax.random.normal(jax.random.PRNGKey(1), (4, 8, 256), dtype=jnp.float32)
    out2 = jax.block_until_ready(normalize_over_window(x2))
    assert jnp.allclose(out2, _reference(x2), atol=1e-6, rtol=1e-5), \
        "mismatch (lane-dense path)"

    # bf16 input: exercises the f32-scale computation inside the kernel.
    xb = jax.random.normal(jax.random.PRNGKey(2), (2, 8, 32), dtype=jnp.bfloat16)
    outb = jax.block_until_ready(normalize_over_window(xb))
    refb = _reference(xb.astype(jnp.float32))
    assert jnp.allclose(outb.astype(jnp.float32), refb, atol=2e-2), \
        "mismatch (bf16 path)"

    print("KERNEL_OK")
</pallas_src>

<mosaic_0001>
module attributes {stable_mosaic.version = 11 : i64} {
  func.func @kernel(%arg0: i32, %arg1: i32, %arg2: memref<1x8x32xf32, #tpu.memory_space<vmem>>, %arg3: memref<1x8x32xf32, #tpu.memory_space<vmem>>) attributes {dimension_semantics = [#tpu.dimension_semantics<parallel>, #tpu.dimension_semantics<parallel>], iteration_bounds = array<i64: 2, 1>, scalar_prefetch = 0 : i64, scratch_operands = 0 : i64, tpu.core_type = #tpu.core_type<tc>, window_params = [{transform_indices = @transform_0, window_bounds = array<i64: 1, 8, 32>}, {transform_indices = @transform_1, window_bounds = array<i64: 1, 8, 32>}]} {
    %c0 = arith.constant 0 : index
    %c0_0 = arith.constant 0 : index
    %c0_1 = arith.constant 0 : index
    %0 = vector.load %arg2[%c0, %c0_0, %c0_1] : memref<1x8x32xf32, #tpu.memory_space<vmem>>, vector<1x8x32xf32>
    %cst = arith.constant dense<0x7F800000> : vector<1x32xf32>
    %1 = vector.multi_reduction <minimumf>, %0, %cst [1] : vector<1x8x32xf32> to vector<1x32xf32>
    %2 = vector.shape_cast %1 : vector<1x32xf32> to vector<1x1x32xf32>
    %cst_2 = arith.constant dense<0xFF800000> : vector<1x32xf32>
    %3 = vector.multi_reduction <maximumf>, %0, %cst_2 [1] : vector<1x8x32xf32> to vector<1x32xf32>
    %4 = vector.shape_cast %3 : vector<1x32xf32> to vector<1x1x32xf32>
    %5 = arith.subf %4, %2 : vector<1x1x32xf32>
    %cst_3 = arith.constant 9.99999993E-9 : f32
    %6 = vector.broadcast %cst_3 : f32 to vector<1x1x32xf32>
    %7 = arith.addf %5, %6 : vector<1x1x32xf32>
    %cst_4 = arith.constant 1.000000e+00 : f32
    %8 = vector.broadcast %cst_4 : f32 to vector<1x1x32xf32>
    %9 = arith.divf %8, %7 : vector<1x1x32xf32>
    %10 = vector.broadcast %2 : vector<1x1x32xf32> to vector<1x8x32xf32>
    %11 = arith.subf %0, %10 : vector<1x8x32xf32>
    %12 = vector.broadcast %9 : vector<1x1x32xf32> to vector<1x8x32xf32>
    %13 = arith.mulf %11, %12 : vector<1x8x32xf32>
    %c0_5 = arith.constant 0 : index
    %c0_6 = arith.constant 0 : index
    %c0_7 = arith.constant 0 : index
    %14 = vector.load %arg3[%c0_5, %c0_6, %c0_7] : memref<1x8x32xf32, #tpu.memory_space<vmem>>, vector<1x8x32xf32>
    tpu.vector_store %arg3[%c0_5, %c0_6, %c0_7], %13 {strides = array<i32>} : memref<1x8x32xf32, #tpu.memory_space<vmem>>, vector<1x8x32xf32>,
    return
  }
  func.func @transform_0(%arg0: i32, %arg1: i32) -> (i32, i32, i32) {
    %c0_i32 = arith.constant 0 : i32
    %c0_i32_0 = arith.constant 0 : i32
    return %arg0, %c0_i32, %arg1 : i32, i32, i32
  }
  func.func @transform_1(%arg0: i32, %arg1: i32) -> (i32, i32, i32) {
    %c0_i32 = arith.constant 0 : i32
    %c0_i32_0 = arith.constant 0 : i32
    return %arg0, %c0_i32, %arg1 : i32, i32, i32
  }
}

</mosaic_0001>

<llo_original>
// kernel: tpu_custom_call.1
$region0: #{tpu_custom_call.1}
  #allocation0 [shape = 'u32[]', space=smem, size = 0x4, offset = 0x4, fixed_abs, tag = 'smem constant byte address 0x4 - core index']
  #allocation1 [shape = 'u32[144,128]{1,0:T(1,128)}', space=vmem, size = 0x12000, scoped, tag = 'internal scratch']
  %s0 = inlined_call_operand.hbm [shape: f32[2,8,32], index: 0, kind: input, shape index: {}]
  %s1 = inlined_call_operand.hbm [shape: f32[2,8,32], index: 1, kind: output, shape index: {}]
  %s2 = sld [smem:[#allocation0]]
  $region41: #{tpu_custom_call.1} parent=0
    _
  %s4 = ssub.s32 1, %s2
  %s5 = scalar_select 0, %s4, %s2
  $region1: #{tpu_custom_call.1} parent=0
    #allocation2 [shape = 'u8[8192]{0}', space=vmem, size = 0x2000, scoped, tag = 'input window, operand 0']
    #allocation3 [shape = 's32[2]{0}', space=sflag, size = 0x8, scoped, tag = 'scoped memory for tpu_custom_call.1']
    #allocation4 [shape = 's32[2]{0}', space=sflag, size = 0x8, scoped, tag = 'scoped memory for tpu_custom_call.1']
    #allocation5 [shape = 'u8[8192]{0}', space=vmem, size = 0x2000, scoped, tag = 'output window, operand 0']
    %6 = vsyncpa [#allocation3], 0
    %s7 = scalar_lea.sflag [#allocation3], 1
    %8 = vsyncpa %s7, 0
    %9 = vsyncpa [#allocation4], 0
    %s10 = scalar_lea.sflag [#allocation4], 1
    %11 = vsyncpa %s10, 0
    loop: start=0, step=1, limit=4
    $region2: #{tpu_custom_call.1} parent=1 // loop_pre_header
      _
    $region3: #{tpu_custom_call.1} parent=1 // loop_header
      %s13 = sphi 0, %s17
      %p14 = scmp.ge.s32.totalorder %s13, 4
      %s20 = sphi 0, %s32
      %s21 = sphi 0, %s28
      %s22 = sphi 0, %s20
      %s23 = sphi 0, %s21
      %s24 = sphi 0, %s22
      %s25 = sphi 0, %s23
      %s37 = sphi 0, %s39
      %s40 = sphi 0, %s37
      %s41 = sphi 0, %s40
      %s57 = sphi 0, %s41
      %s65 = sphi 0, %s67
      %s68 = sphi 0, %s65
      %s69 = sphi 0, %s68
      %s85 = sphi 0, %s69
    $region4: #{tpu_custom_call.1} parent=1 // loop_header_branch
      %16 = sbr.rel (%p14) target = $region8
    $region5: #{tpu_custom_call.1} parent=1 // loop_body
      %s18 = ssub.s32 %s13, 1
      %s19 = ssub.s32 %s13, 2
      %s26 = sadd.s32 1, %s21
      %p27 = scmp.ge.s32.totalorder %s26, 1
      %s28 = scalar_select %p27, 0, %s26
      %s29 = sadd.s32 1, %s20
      %s30 = scalar_select %p27, %s29, %s20
      %p31 = scmp.ge.s32.totalorder %s30, 2
      %s32 = scalar_select %p31, 0, %s30
      %s33 = ssub.s32 %s20, %s32
      %s34 = ssub.s32 %s21, %s28
      %s35 = sor.u32 %s33, %s34
      %p36 = scmp.eq.s32.totalorder %s35, 0
      %s38 = sadd.s32 %s37, 1
      %s39 = scalar_select %p36, %s37, %s38
      %p42 = pneg %p36
      %p43 = scmp.eq.s32.totalorder %s13, 1
      %p44 = por %p42, %p43
      %p45 = scmp.ne.s32.totalorder %s37, %s40
      %p46 = scmp.eq.s32.totalorder %s13, 0
      %p47 = por %p45, %p46
      %p48 = scmp.ne.s32.totalorder %s37, %s40
      %p49 = scmp.eq.s32.totalorder %s18, 1
      %p50 = por %p48, %p49
      %p51 = scmp.ne.s32.totalorder %s40, %s41
      %p52 = scmp.eq.s32.totalorder %s18, 0
      %p53 = por %p51, %p52
      %p54 = scmp.ne.s32.totalorder %s40, %s41
      %p55 = scmp.eq.s32.totalorder %s19, 1
      %p56 = por %p54, %p55
      %p58 = scmp.ne.s32.totalorder %s41, %s57
      %p59 = scmp.eq.s32.totalorder %s19, 0
      %p60 = por %p58, %p59
      %s61 = ssub.s32 %s20, %s32
      %s62 = ssub.s32 %s21, %s28
      %s63 = sor.u32 %s61, %s62
      %p64 = scmp.eq.s32.totalorder %s63, 0
      %s66 = sadd.s32 %s65, 1
      %s67 = scalar_select %p64, %s65, %s66
      %p70 = pneg %p64
      %p71 = scmp.eq.s32.totalorder %s13, 1
      %p72 = por %p70, %p71
      %p73 = scmp.ne.s32.totalorder %s65, %s68
      %p74 = scmp.eq.s32.totalorder %s13, 0
      %p75 = por %p73, %p74
      %p76 = scmp.ne.s32.totalorder %s65, %s68
      %p77 = scmp.eq.s32.totalorder %s18, 1
      %p78 = por %p76, %p77
      %p79 = scmp.ne.s32.totalorder %s68, %s69
      %p80 = scmp.eq.s32.totalorder %s18, 0
      %p81 = por %p79, %p80
      %p82 = scmp.ne.s32.totalorder %s68, %s69
      %p83 = scmp.eq.s32.totalorder %s19, 1
      %p84 = por %p82, %p83
      %p86 = scmp.ne.s32.totalorder %s69, %s85
      %p87 = scmp.eq.s32.totalorder %s19, 0
      %p88 = por %p86, %p87
      %p89 = scmp.le.s32.totalorder 1, %s13
      %p90 = scmp.lt.s32.totalorder %s13, 3
      %p91 = pnand %p89, %p90
      %p92 = pneg %p91
      // Predicated region
      $region9: #{tpu_custom_call.1} parent=5 // pred_check
        _
      $region10: #{tpu_custom_call.1} parent=5 // pred_check_branch
        %94 = sbr.rel (%p91) target = $region12
      $region11: #{tpu_custom_call.1} parent=5 // pred_region
        %s95 = ssub.s32 %s13, 1
      $region12: #{tpu_custom_call.1} parent=5 // pred_fallthru
        _
      %p96 = scmp.lt.s32.totalorder %s13, 2
      // Predicated region
      $region13: #{tpu_custom_call.1} parent=5 // pred_check
        %p97 = pneg %p96
      $region14: #{tpu_custom_call.1} parent=5 // pred_check_branch
        %99 = sbr.rel (%p97) target = $region16
      $region15: #{tpu_custom_call.1} parent=5 // pred_region
        // Predicated region
        $region17: #{tpu_custom_call.1} parent=15 // pred_check
          %p100 = pneg %p47
        $region18: #{tpu_custom_call.1} parent=15 // pred_check_branch
          %102 = sbr.rel (%p100) target = $region20
        $region19: #{tpu_custom_call.1} parent=15 // pred_region
          %s103 = sand.u32 %s37, 1
          %s104 = scalar_lea.sflag [#allocation3], %s103
          %s105 = sand.u32 %s37, 1
          %s106 = smul.addr %s105, 8
          %s107 = scalar_lea.vmem [#allocation2], %s106
          %s109 = ssub.s32 128, 128
          %110 = vsyncadd %s104, %s109
          %s111 = sadd.s32 %s21, %s20
          %s112 = smul.addr %s111, 128
          %s113 = scalar_lea.hbm %s0, %s112
          %s115 = sshll.u32 %s107, 4
          %s116 = int_to_ptr.vmem [resolvable:$true] %s115
          %118 = dma.hbm_to_vmem [thread:$0]  %s113, 128, %s116, %s104
        $region20: #{tpu_custom_call.1} parent=15 // pred_fallthru
          _
      $region16: #{tpu_custom_call.1} parent=5 // pred_fallthru
        _
      %p119 = scmp.le.s32.totalorder 1, %s13
      %p120 = scmp.lt.s32.totalorder %s13, 3
      %p121 = pnand %p119, %p120
      %p122 = pneg %p121
      // Predicated region
      $region21: #{tpu_custom_call.1} parent=5 // pred_check
        _
      $region22: #{tpu_custom_call.1} parent=5 // pred_check_branch
        %124 = sbr.rel (%p121) target = $region24
      $region23: #{tpu_custom_call.1} parent=5 // pred_region
        %s125 = ssub.s32 %s13, 1
        %s126 = sand.u32 %s40, 1
        %s127 = scalar_lea.sflag [#allocation3], %s126
        %s128 = sand.u32 %s40, 1
        %s129 = smul.addr %s128, 8
        %s130 = scalar_lea.vmem [#allocation2], %s129
        // Predicated region
        $region25: #{tpu_custom_call.1} parent=23 // pred_check
          %p131 = pneg %p53
        $region26: #{tpu_custom_call.1} parent=23 // pred_check_branch
          %133 = sbr.rel (%p131) target = $region28
        $region27: #{tpu_custom_call.1} parent=23 // pred_region
          %134 = dma.done %s127, 128
        $region28: #{tpu_custom_call.1} parent=23 // pred_fallthru
          _
        %s135 = sand.u32 %s40, 1
        %s136 = scalar_lea.sflag [#allocation3], %s135
        %s137 = sand.u32 %s40, 1
        %s138 = smul.addr %s137, 8
        %s139 = scalar_lea.vmem [#allocation2], %s138
        %p140 = pneg %p53
        %p141 = pneg %p50
        %p142 = pneg %p81
        %p143 = pneg %p78
        %s144 = sand.u32 %s68, 1
        %s145 = scalar_lea.sflag [#allocation4], %s144
        %s146 = sand.u32 %s68, 1
        %s147 = smul.addr %s146, 8
        %s148 = scalar_lea.vmem [#allocation5], %s147
        %v149 = vld [vmem:[%s130] sm:$0xff]
        %vm150 = vcmask 261120
        %v151 = vsel %vm150, %v149, inf
        %v152 = vrot.slane %v151, 4
        %v153 = vmin.f32 %v151, %v152
        %v154 = vrot.slane %v153, 2
        %v155 = vmin.f32 %v153, %v154
        %v156 = vrot.slane %v155, 1
        %v157 = vmin.f32 %v155, %v156
        %v158 = vsel %vm150, %v149, -inf
        %v159 = vrot.slane %v158, 4
        %v160 = vmax.f32 %v158, %v159
        %v161 = vrot.slane %v160, 2
        %v162 = vmax.f32 %v160, %v161
        %v163 = vrot.slane %v162, 1
        %v164 = vmax.f32 %v162, %v163
        %v165 = vsub.f32 %v164, %v157
        %v166 = vadd.f32 %v165, 1e-08
        %v167 = vrcp.pop %v166
        %v168 = vmul.f32 1.0, %v167
        %v169 = vsub.f32 %v149, %v157
        %v170 = vmul.f32 %v169, %v168
        %171 = vst.msk [vmem:[%s148] sm:$0xff] %vm150, %v170
        %s172 = sand.u32 %s68, 1
        %s173 = scalar_lea.sflag [#allocation4], %s172
        %s174 = sand.u32 %s68, 1
        %s175 = smul.addr %s174, 8
        %s176 = scalar_lea.vmem [#allocation5], %s175
        // Predicated region
        $region29: #{tpu_custom_call.1} parent=23 // pred_check
          %p177 = pneg %p78
        $region30: #{tpu_custom_call.1} parent=23 // pred_check_branch
          %179 = sbr.rel (%p177) target = $region32
        $region31: #{tpu_custom_call.1} parent=23 // pred_region
          %s181 = ssub.s32 128, 128
          %182 = vsyncadd %s173, %s181
          %s183 = sadd.s32 %s23, %s22
          %s184 = smul.addr %s183, 128
          %s185 = scalar_lea.hbm %s1, %s184
          %s187 = sshll.u32 %s176, 4
          %s188 = int_to_ptr.vmem [resolvable:$true] %s187
          %190 = dma.vmem_to_hbm [thread:$0]  %s188, 128, %s185, %s173
        $region32: #{tpu_custom_call.1} parent=23 // pred_fallthru
          _
      $region24: #{tpu_custom_call.1} parent=5 // pred_fallthru
        _
      %p191 = scmp.le.s32.totalorder 2, %s13
      // Predicated region
      $region33: #{tpu_custom_call.1} parent=5 // pred_check
        %p192 = pneg %p191
      $region34: #{tpu_custom_call.1} parent=5 // pred_check_branch
        %194 = sbr.rel (%p192) target = $region36
      $region35: #{tpu_custom_call.1} parent=5 // pred_region
        %s195 = ssub.s32 %s13, 2
        // Predicated region
        $region37: #{tpu_custom_call.1} parent=35 // pred_check
          %p196 = pneg %p84
        $region38: #{tpu_custom_call.1} parent=35 // pred_check_branch
          %198 = sbr.rel (%p196) target = $region40
        $region39: #{tpu_custom_call.1} parent=35 // pred_region
          %s199 = sand.u32 %s69, 1
          %s200 = scalar_lea.sflag [#allocation4], %s199
          %s201 = sand.u32 %s69, 1
          %s202 = smul.addr %s201, 8
          %s203 = scalar_lea.vmem [#allocation5], %s202
          %204 = dma.done %s200, 128
        $region40: #{tpu_custom_call.1} parent=35 // pred_fallthru
          _
      $region36: #{tpu_custom_call.1} parent=5 // pred_fallthru
        _
    $region6: #{tpu_custom_call.1} parent=1 // loop_footer
      %s17 = sadd.s32 1, %s13
    $region7: #{tpu_custom_call.1} parent=1 // loop_footer_branch
      %12 = sbr.rel target = $region3
    $region8: #{tpu_custom_call.1} parent=1 // loop_exit
      _
    %205 = vsyncpa [#allocation3], 1
    %s206 = scalar_lea.sflag [#allocation3], 1
    %207 = vsyncpa %s206, 1
    %208 = vsyncpa [#allocation4], 1
    %s209 = scalar_lea.sflag [#allocation4], 1
    %210 = vsyncpa %s209, 1

</llo_original>
